<compile_context>
chip_gen: v7x
topology: tpu7x:2x2x1
jax: 0.10.0
libtpu: 0.0.40
codegen_flags: <defaults>
</compile_context>

<pallas_src>
import functools

import jax
import jax.numpy as jnp
import numpy as np
from jax.experimental import pallas as pl
from jax.experimental.pallas import tpu as pltpu

_MXU_MIN_CI = 32   # below this, a VPU broadcast-MAC projection beats an under-filled MXU dot


def _round_up(a, m):
    return (a + m - 1) // m * m


def _cdiv(a, b):
    return -(-a // b)


def _vmem_budget_bytes():
    """Generation-aware per-step VMEM budget: 75% of physical VMEM, 48 MiB fallback."""
    try:
        info = pltpu.get_tpu_info()
        phys = int(getattr(info, "vmem_capacity_bytes", 0)) or (64 << 20)
    except Exception:
        phys = 64 << 20            # conservative (v7x-sized) fallback
    return int(phys * 3 // 4)


def _rel_bias(rel_h, rel_w, out_channels, kh, kw):
    """Build the (C_out, K) positional bias matching the module's rel_h/rel_w broadcasting."""
    half = out_channels // 2
    K = kh * kw
    rel_hm = rel_h.reshape(half, kh)                              # depends on kernel row i
    rel_wm = rel_w.reshape(half, kw)                              # depends on kernel col j
    top = jnp.broadcast_to(rel_hm[:, :, None], (half, kh, kw)).reshape(half, K)
    bot = jnp.broadcast_to(rel_wm[:, None, :], (half, kh, kw)).reshape(half, K)
    return jnp.concatenate([top, bot], axis=0)                    # (Co, K)


def _attn_conv_kernel(x_ref, w_ref, rel_ref, out_ref, proj_ref, *,
                      co_p, ls, offs, d_q, n_ci, use_mxu):
    """One row-tile of one batch image of the AttentionConv forward.

    x_ref   : (1, Ci_p, NP)    flat padded tile (row stride rs), zero padded to NP lanes
    w_ref   : (3*Co_p, Ci_p)   fused [Wq ; Wk ; Wv] 1x1-conv weights
    rel_ref : (Co_p, K)        relative positional bias (rel_h / rel_w halves)
    out_ref : (1, Co_p, LS)    output in the same flat layout (valid pixels at r*rs + w)
    proj_ref: (3*Co_p, NP)     VMEM scratch holding the fused Q/K/V projection
    """
    # --- fused Q/K/V projection -------------------------------------------------------
    if use_mxu:
        # One wide MXU matmul over every pixel of the tile (+halo).
        proj = jnp.dot(w_ref[...], x_ref[0], preferred_element_type=jnp.float32)
    else:
        # Small-Ci path: Ci-term VPU broadcast-MAC (the MXU would be <15% filled).
        proj = (w_ref[:, 0:1] * x_ref[0, 0:1, :]).astype(jnp.float32)
        for c in range(1, n_ci):
            proj = proj + w_ref[:, c:c + 1] * x_ref[0, c:c + 1, :]
    proj_ref[...] = proj.astype(proj_ref.dtype)

    rel = rel_ref[...]                                            # (Co_p, K), compute dtype
    kb, vb = co_p, 2 * co_p                                       # K / V plane base rows
    q = proj_ref[0:co_p, d_q:d_q + ls]                            # (Co_p, LS)

    # --- pass 1: max over the K window positions --------------------------------------
    m = q * (proj_ref[kb:kb + co_p, offs[0]:offs[0] + ls] + rel[:, 0:1])
    for idx in range(1, len(offs)):
        d = offs[idx]
        s = q * (proj_ref[kb:kb + co_p, d:d + ls] + rel[:, idx:idx + 1])
        m = jnp.maximum(m, s)

    # --- pass 2: exp + accumulate (single exp per position; l/acc stay f32) -----------
    l = None
    acc = None
    for idx in range(len(offs)):
        d = offs[idx]
        s = q * (proj_ref[kb:kb + co_p, d:d + ls] + rel[:, idx:idx + 1])
        p = jnp.exp((s - m).astype(jnp.float32))
        pv = p * proj_ref[vb:vb + co_p, d:d + ls]                 # promotes to f32
        if idx == 0:
            l, acc = p, pv
        else:
            l, acc = l + p, acc + pv

    out_ref[0] = (acc * pl.reciprocal(l, approx=False)).astype(out_ref.dtype)


def attention_conv(x, wq, wk, wv, rel_h, rel_w, *, kernel_size, stride=1,
                   padding=(0, 0, 0, 0), groups=1, compute_dtype=jnp.float32,
                   row_tile=None):
    """JAX/Pallas equivalent of AttentionConv.forward.  x is NCHW; returns NCHW
    in `compute_dtype`."""
    B, Ci, H, W = x.shape
    Co = wq.shape[0]
    kh, kw = kernel_size
    K = kh * kw
    # `groups` only reshapes channels in the reference forward; the softmax axis is the
    # window axis, so groups is a compute no-op (kept for interface fidelity).
    assert Co % groups == 0
    assert stride == 1, "Pallas path supports stride=1 (the module's view() requires it)"
    pad_l, pad_r, pad_t, pad_b = padding
    Hp, Wp = H + pad_t + pad_b, W + pad_l + pad_r
    # The PyTorch module's .view(batch, groups, C, height, width, -1) implicitly requires
    # the unfolded spatial size to equal the input spatial size.
    assert Hp - kh + 1 == H and Wp - kw + 1 == W, \
        "padding/kernel must preserve the spatial size"

    itemsize = jnp.dtype(compute_dtype).itemsize
    cmult = 8 * (4 // itemsize)                    # sublane packing: 8 (f32) / 16 (bf16)
    ci_p = _round_up(Ci, cmult)
    co_p = _round_up(Co, cmult)

    # Lane-aligned row stride, gated on W: pad the row stride to a multiple of 128 only
    # when the blowup is <= 2x (W >= ~62); for small W keep the compact stride.
    wp128 = _round_up(Wp, 128)
    rs = wp128 if wp128 <= 2 * Wp else Wp

    # Flat, padded, row-major pixel layout (row stride = rs).  With stride 1, the K/V
    # values of window position (i, j) for *every* output pixel of the tile are one
    # lane-shifted slice of the projected padded tile at offset i*rs + j; the query lives
    # at offset pad_t*rs + pad_l.
    d_max = (kh - 1) * rs + (kw - 1)
    d_q = pad_t * rs + pad_l
    offs = tuple(i * rs + j for i in range(kh) for j in range(kw))
    budget = _vmem_budget_bytes()

    def _plan(th):
        ls = _round_up(th * rs, 128)                               # lanes per output tile
        np_tile = _round_up(d_max + ls, 128)                       # lanes per input tile
        est = (2 * ci_p * np_tile * itemsize                       # double-buffered input
               + 2 * (3 * co_p * ci_p + co_p * K) * itemsize       # weights + rel bias
               + 2 * co_p * ls * itemsize                          # double-buffered output
               + 3 * co_p * np_tile * itemsize                     # projection scratch
               + 8 * co_p * ls * 4)                                # live f32 softmax temps
        return est, ls, np_tile

    # Row-tile selection: whole image when it fits, otherwise halve until it does.
    if row_tile is not None:
        th = max(1, min(int(row_tile), H))
    else:
        th = H
        while th > 1 and _plan(th)[0] > budget:
            th = (th + 1) // 2
    est, ls, np_tile = _plan(th)
    if est > budget:
        raise ValueError(
            f"AttentionConv working set (~{est >> 20} MiB for a {th}-row tile) exceeds the "
            f"VMEM budget ({budget >> 20} MiB); reduce row_tile / channels / image width.")
    T = _cdiv(H, th)
    rows_tile = th + kh - 1                                        # tile rows + halo

    # ---- build the (B*T, Ci_p, NP) flat tiled input ---------------------------------
    # Rows padded so every tile (incl. the possibly over-running last one) has its halo;
    # columns padded to the (possibly lane-aligned) row stride rs.
    xpad = jnp.pad(x, ((0, 0), (0, 0),
                       (pad_t, pad_b + (T * th - H)),
                       (pad_l, pad_r + (rs - Wp))))                # (B, Ci, T*th+kh-1, rs)
    if T == 1:
        x_tiles = xpad[:, None]                                    # no halo duplication
    else:
        x_tiles = jnp.stack([xpad[:, :, t * th: t * th + rows_tile, :] for t in range(T)],
                            axis=1)                                # (B, T, Ci, rows_tile, rs)
    x_tiles = x_tiles.reshape(B * T, Ci, rows_tile * rs)
    x_tiles = jnp.pad(x_tiles, ((0, 0), (0, ci_p - Ci), (0, np_tile - rows_tile * rs)))
    x_tiles = x_tiles.astype(compute_dtype)                        # (B*T, Ci_p, NP)

    def _pad_w(w):
        return jnp.pad(w.reshape(Co, Ci), ((0, co_p - Co), (0, ci_p - Ci)))
    w_all = jnp.concatenate([_pad_w(wq), _pad_w(wk), _pad_w(wv)], axis=0)
    w_all = w_all.astype(compute_dtype)                            # (3*Co_p, Ci_p)

    rel = _rel_bias(rel_h, rel_w, Co, kh, kw)                      # (Co, K)
    rel = jnp.pad(rel, ((0, co_p - Co), (0, 0))).astype(compute_dtype)

    kernel = functools.partial(_attn_conv_kernel, co_p=co_p, ls=ls, offs=offs, d_q=d_q,
                               n_ci=Ci, use_mxu=(Ci >= _MXU_MIN_CI))

    out_flat = pl.pallas_call(
        kernel,
        out_shape=jax.ShapeDtypeStruct((B * T, co_p, ls), compute_dtype),
        grid_spec=pltpu.PrefetchScalarGridSpec(
            num_scalar_prefetch=0,
            grid=(B * T,),                                          # shards across both TCs
            in_specs=[
                pl.BlockSpec((1, ci_p, np_tile), lambda b: (b, 0, 0)),   # flat padded tile
                pl.BlockSpec((3 * co_p, ci_p), lambda b: (0, 0)),        # fused Wq|Wk|Wv
                pl.BlockSpec((co_p, K), lambda b: (0, 0)),               # rel bias
            ],
            out_specs=pl.BlockSpec((1, co_p, ls), lambda b: (b, 0, 0)),
            scratch_shapes=[pltpu.VMEM((3 * co_p, np_tile), compute_dtype)],
        ),
        compiler_params=pltpu.CompilerParams(
            dimension_semantics=("parallel",),
            vmem_limit_bytes=budget),
    )(x_tiles, w_all, rel)

    # (B*T, Co_p, LS) -> (B, Co, H, W): valid pixels of tile t live at lane r_local*rs + w.
    # (The final strided slice is one cheap XLA copy; rs - W extra lanes per row only.)
    out = out_flat.reshape(B, T, co_p, ls)[:, :, :Co, :th * rs]
    out = out.reshape(B, T, Co, th, rs)[..., :W]
    out = jnp.transpose(out, (0, 2, 1, 3, 4)).reshape(B, Co, T * th, W)[:, :, :H, :]
    return out


def attention_conv_reference(x, wq, wk, wv, rel_h, rel_w, *, kernel_size, stride, padding):
    """Pure-JAX mirror of the PyTorch forward, for validation."""
    B, Ci, H, W = x.shape
    Co = wq.shape[0]
    kh, kw = kernel_size
    pad_l, pad_r, pad_t, pad_b = padding
    wq2, wk2, wv2 = wq.reshape(Co, Ci), wk.reshape(Co, Ci), wv.reshape(Co, Ci)

    q = jnp.einsum('oc,bchw->bohw', wq2, x)
    xpad = jnp.pad(x, ((0, 0), (0, 0), (pad_t, pad_b), (pad_l, pad_r)))
    kf = jnp.einsum('oc,bchw->bohw', wk2, xpad)
    vf = jnp.einsum('oc,bchw->bohw', wv2, xpad)

    kp = jnp.stack([kf[:, :, i:i + stride * (H - 1) + 1:stride,
                       j:j + stride * (W - 1) + 1:stride]
                    for i in range(kh) for j in range(kw)], axis=-1)   # (B,Co,H,W,K)
    vp = jnp.stack([vf[:, :, i:i + stride * (H - 1) + 1:stride,
                       j:j + stride * (W - 1) + 1:stride]
                    for i in range(kh) for j in range(kw)], axis=-1)

    rel = _rel_bias(rel_h, rel_w, Co, kh, kw)                          # (Co, K)
    logits = q[..., None] * (kp + rel[None, :, None, None, :])
    attn = jax.nn.softmax(logits, axis=-1)
    return jnp.sum(attn * vp, axis=-1)                                 # (B, Co, H, W)


def _init_params(key, Ci, Co, kh, kw):
    """Deterministic init mimicking the module: kaiming_normal_(fan_out, relu) for the
    1x1 conv weights (std = sqrt(2 / Co)), N(0,1) for rel_h / rel_w."""
    k2, k3, k4, k5, k6 = jax.random.split(key, 5)
    std = (2.0 / Co) ** 0.5
    wq = jax.random.normal(k2, (Co, Ci, 1, 1), jnp.float32) * std
    wk = jax.random.normal(k3, (Co, Ci, 1, 1), jnp.float32) * std
    wv = jax.random.normal(k4, (Co, Ci, 1, 1), jnp.float32) * std
    rel_h = jax.random.normal(k5, (Co // 2, 1, 1, kh, 1), jnp.float32)
    rel_w = jax.random.normal(k6, (Co // 2, 1, 1, 1, kw), jnp.float32)
    return wq, wk, wv, rel_h, rel_w


if __name__ == "__main__":
    kh, kw = 3, 3
    padding = (1, 1, 1, 1)            # F.pad order: (left, right, top, bottom)

    key = jax.random.PRNGKey(0)
    kx, kp = jax.random.split(key)

    # Small module config: B=2, Ci=4, Co=8, 16x16, 3x3 window, pad 1, groups=2.
    B, Ci, Co, H, W = 2, 4, 8, 16, 16
    x = jax.random.normal(kx, (B, Ci, H, W), jnp.float32)
    wq, wk, wv, rel_h, rel_w = _init_params(kp, Ci, Co, kh, kw)
    ref = attention_conv_reference(x, wq, wk, wv, rel_h, rel_w,
                                   kernel_size=(kh, kw), stride=1, padding=padding)

    # A) f32, whole image per grid step (T=1), compact stride, VPU projection (Ci < 32).
    out = jax.block_until_ready(
        attention_conv(x, wq, wk, wv, rel_h, rel_w,
                       kernel_size=(kh, kw), padding=padding, groups=2))
    assert out.shape == (B, Co, H, W), out.shape
    if not np.allclose(np.asarray(out), np.asarray(ref), rtol=1e-3, atol=1e-3):
        raise AssertionError("f32 Pallas kernel output does not match reference")

    # B) f32 with forced row tiling (row_tile=6 -> 3 tiles, non-dividing H): exercises the
    #    pixel-tile grid axis that bounds the VMEM working set on large images.
    out_t = jax.block_until_ready(
        attention_conv(x, wq, wk, wv, rel_h, rel_w,
                       kernel_size=(kh, kw), padding=padding, groups=2, row_tile=6))
    if not np.allclose(np.asarray(out_t), np.asarray(ref), rtol=1e-3, atol=1e-3):
        raise AssertionError("row-tiled Pallas kernel output does not match reference")

    # C) bf16 compute / bf16 projection scratch / bf16 output (v6e/v7x path).
    out_bf = jax.block_until_ready(
        attention_conv(x, wq, wk, wv, rel_h, rel_w,
                       kernel_size=(kh, kw), padding=padding, groups=2,
                       compute_dtype=jnp.bfloat16))
    assert out_bf.shape == (B, Co, H, W), out_bf.shape
    assert out_bf.dtype == jnp.bfloat16, out_bf.dtype
    out_bf32 = np.asarray(out_bf.astype(jnp.float32))
    if not np.isfinite(out_bf32).all():
        raise AssertionError("bf16 Pallas kernel produced non-finite values")
    if float(np.max(np.abs(out_bf32 - np.asarray(ref)))) > 0.5:
        raise AssertionError("bf16 Pallas kernel output far from reference")

    # D) Larger-channel / wider-image config: exercises the MXU projection path (Ci >= 32)
    #    and the lane-aligned row stride (W >= ~62 -> row stride padded to 128).
    B2, Ci2, Co2, H2, W2 = 1, 40, 16, 64, 64
    x2 = jax.random.normal(jax.random.fold_in(kx, 1), (B2, Ci2, H2, W2), jnp.float32)
    wq2, wk2, wv2, rh2, rw2 = _init_params(jax.random.fold_in(kp, 1), Ci2, Co2, kh, kw)
    ref2 = attention_conv_reference(x2, wq2, wk2, wv2, rh2, rw2,
                                    kernel_size=(kh, kw), stride=1, padding=padding)
    out2 = jax.block_until_ready(
        attention_conv(x2, wq2, wk2, wv2, rh2, rw2,
                       kernel_size=(kh, kw), padding=padding))
    assert out2.shape == (B2, Co2, H2, W2), out2.shape
    if not np.allclose(np.asarray(out2), np.asarray(ref2), rtol=1e-3, atol=1e-3):
        raise AssertionError("MXU / aligned-stride Pallas kernel output does not match reference")

    print("KERNEL_OK")
</pallas_src>

<mosaic_0001>
module attributes {stable_mosaic.version = 11 : i64} {
  func.func @_attn_conv_kernel(%arg0: i32, %arg1: memref<1x8x512xf32, #tpu.memory_space<vmem>>, %arg2: memref<24x8xf32, #tpu.memory_space<vmem>>, %arg3: memref<8x9xf32, #tpu.memory_space<vmem>>, %arg4: memref<1x8x384xf32, #tpu.memory_space<vmem>>, %arg5: memref<24x512xf32, #tpu.memory_space<vmem>>) attributes {dimension_semantics = [#tpu.dimension_semantics<parallel>], iteration_bounds = array<i64: 2>, scalar_prefetch = 0 : i64, scratch_operands = 1 : i64, tpu.core_type = #tpu.core_type<tc>, window_params = [{transform_indices = @transform_0, window_bounds = array<i64: 1, 8, 512>}, {pipeline_mode = #tpu.pipeline_mode<synchronous>, transform_indices = @transform_1, window_bounds = array<i64: 24, 8>}, {pipeline_mode = #tpu.pipeline_mode<synchronous>, transform_indices = @transform_2, window_bounds = array<i64: 8, 9>}, {transform_indices = @transform_3, window_bounds = array<i64: 1, 8, 384>}]} {
    %c0 = arith.constant 0 : index
    %c0_0 = arith.constant 0 : index
    %0 = vector.load %arg2[%c0, %c0_0] : memref<24x8xf32, #tpu.memory_space<vmem>>, vector<24x1xf32>
    %c0_1 = arith.constant 0 : index
    %c0_2 = arith.constant 0 : index
    %c0_3 = arith.constant 0 : index
    %1 = vector.load %arg1[%c0_1, %c0_2, %c0_3] : memref<1x8x512xf32, #tpu.memory_space<vmem>>, vector<1x1x512xf32>
    %2 = vector.shape_cast %1 : vector<1x1x512xf32> to vector<1x512xf32>
    %3 = vector.broadcast %0 : vector<24x1xf32> to vector<24x512xf32>
    %4 = vector.broadcast %2 : vector<1x512xf32> to vector<24x512xf32>
    %5 = arith.mulf %3, %4 : vector<24x512xf32>
    %c0_4 = arith.constant 0 : index
    %c1 = arith.constant 1 : index
    %6 = vector.load %arg2[%c0_4, %c1] : memref<24x8xf32, #tpu.memory_space<vmem>>, vector<24x1xf32>
    %c0_5 = arith.constant 0 : index
    %c1_6 = arith.constant 1 : index
    %c0_7 = arith.constant 0 : index
    %7 = vector.load %arg1[%c0_5, %c1_6, %c0_7] : memref<1x8x512xf32, #tpu.memory_space<vmem>>, vector<1x1x512xf32>
    %8 = vector.shape_cast %7 : vector<1x1x512xf32> to vector<1x512xf32>
    %9 = vector.broadcast %6 : vector<24x1xf32> to vector<24x512xf32>
    %10 = vector.broadcast %8 : vector<1x512xf32> to vector<24x512xf32>
    %11 = arith.mulf %9, %10 : vector<24x512xf32>
    %12 = arith.addf %5, %11 : vector<24x512xf32>
    %c0_8 = arith.constant 0 : index
    %c2 = arith.constant 2 : index
    %13 = vector.load %arg2[%c0_8, %c2] : memref<24x8xf32, #tpu.memory_space<vmem>>, vector<24x1xf32>
    %c0_9 = arith.constant 0 : index
    %c2_10 = arith.constant 2 : index
    %c0_11 = arith.constant 0 : index
    %14 = vector.load %arg1[%c0_9, %c2_10, %c0_11] : memref<1x8x512xf32, #tpu.memory_space<vmem>>, vector<1x1x512xf32>
    %15 = vector.shape_cast %14 : vector<1x1x512xf32> to vector<1x512xf32>
    %16 = vector.broadcast %13 : vector<24x1xf32> to vector<24x512xf32>
    %17 = vector.broadcast %15 : vector<1x512xf32> to vector<24x512xf32>
    %18 = arith.mulf %16, %17 : vector<24x512xf32>
    %19 = arith.addf %12, %18 : vector<24x512xf32>
    %c0_12 = arith.constant 0 : index
    %c3 = arith.constant 3 : index
    %20 = vector.load %arg2[%c0_12, %c3] : memref<24x8xf32, #tpu.memory_space<vmem>>, vector<24x1xf32>
    %c0_13 = arith.constant 0 : index
    %c3_14 = arith.constant 3 : index
    %c0_15 = arith.constant 0 : index
    %21 = vector.load %arg1[%c0_13, %c3_14, %c0_15] : memref<1x8x512xf32, #tpu.memory_space<vmem>>, vector<1x1x512xf32>
    %22 = vector.shape_cast %21 : vector<1x1x512xf32> to vector<1x512xf32>
    %23 = vector.broadcast %20 : vector<24x1xf32> to vector<24x512xf32>
    %24 = vector.broadcast %22 : vector<1x512xf32> to vector<24x512xf32>
    %25 = arith.mulf %23, %24 : vector<24x512xf32>
    %26 = arith.addf %19, %25 : vector<24x512xf32>
    %c0_16 = arith.constant 0 : index
    %c0_17 = arith.constant 0 : index
    %27 = vector.load %arg5[%c0_16, %c0_17] : memref<24x512xf32, #tpu.memory_space<vmem>>, vector<24x512xf32>
    tpu.vector_store %arg5[%c0_16, %c0_17], %26 {strides = array<i32>} : memref<24x512xf32, #tpu.memory_space<vmem>>, vector<24x512xf32>,
    %c0_18 = arith.constant 0 : index
    %c0_19 = arith.constant 0 : index
    %28 = vector.load %arg3[%c0_18, %c0_19] : memref<8x9xf32, #tpu.memory_space<vmem>>, vector<8x9xf32>
    %c0_20 = arith.constant 0 : index
    %c19 = arith.constant 19 : index
    %29 = vector.load %arg5[%c0_20, %c19] : memref<24x512xf32, #tpu.memory_space<vmem>>, vector<8x384xf32>
    %c8 = arith.constant 8 : index
    %c0_21 = arith.constant 0 : index
    %30 = vector.load %arg5[%c8, %c0_21] : memref<24x512xf32, #tpu.memory_space<vmem>>, vector<8x384xf32>
    %31 = vector.extract_strided_slice %28 {offsets = [0, 0], sizes = [8, 1], strides = [1, 1]} : vector<8x9xf32> to vector<8x1xf32>
    %32 = vector.broadcast %31 : vector<8x1xf32> to vector<8x384xf32>
    %33 = arith.addf %30, %32 : vector<8x384xf32>
    %34 = arith.mulf %29, %33 : vector<8x384xf32>
    %c8_22 = arith.constant 8 : index
    %c1_23 = arith.constant 1 : index
    %35 = vector.load %arg5[%c8_22, %c1_23] : memref<24x512xf32, #tpu.memory_space<vmem>>, vector<8x384xf32>
    %36 = vector.extract_strided_slice %28 {offsets = [0, 1], sizes = [8, 1], strides = [1, 1]} : vector<8x9xf32> to vector<8x1xf32>
    %37 = vector.broadcast %36 : vector<8x1xf32> to vector<8x384xf32>
    %38 = arith.addf %35, %37 : vector<8x384xf32>
    %39 = arith.mulf %29, %38 : vector<8x384xf32>
    %40 = arith.maximumf %34, %39 : vector<8x384xf32>
    %c8_24 = arith.constant 8 : index
    %c2_25 = arith.constant 2 : index
    %41 = vector.load %arg5[%c8_24, %c2_25] : memref<24x512xf32, #tpu.memory_space<vmem>>, vector<8x384xf32>
    %42 = vector.extract_strided_slice %28 {offsets = [0, 2], sizes = [8, 1], strides = [1, 1]} : vector<8x9xf32> to vector<8x1xf32>
    %43 = vector.broadcast %42 : vector<8x1xf32> to vector<8x384xf32>
    %44 = arith.addf %41, %43 : vector<8x384xf32>
    %45 = arith.mulf %29, %44 : vector<8x384xf32>
    %46 = arith.maximumf %40, %45 : vector<8x384xf32>
    %c8_26 = arith.constant 8 : index
    %c18 = arith.constant 18 : index
    %47 = vector.load %arg5[%c8_26, %c18] : memref<24x512xf32, #tpu.memory_space<vmem>>, vector<8x384xf32>
    %48 = vector.extract_strided_slice %28 {offsets = [0, 3], sizes = [8, 1], strides = [1, 1]} : vector<8x9xf32> to vector<8x1xf32>
    %49 = vector.broadcast %48 : vector<8x1xf32> to vector<8x384xf32>
    %50 = arith.addf %47, %49 : vector<8x384xf32>
    %51 = arith.mulf %29, %50 : vector<8x384xf32>
    %52 = arith.maximumf %46, %51 : vector<8x384xf32>
    %c8_27 = arith.constant 8 : index
    %c19_28 = arith.constant 19 : index
    %53 = vector.load %arg5[%c8_27, %c19_28] : memref<24x512xf32, #tpu.memory_space<vmem>>, vector<8x384xf32>
    %54 = vector.extract_strided_slice %28 {offsets = [0, 4], sizes = [8, 1], strides = [1, 1]} : vector<8x9xf32> to vector<8x1xf32>
    %55 = vector.broadcast %54 : vector<8x1xf32> to vector<8x384xf32>
    %56 = arith.addf %53, %55 : vector<8x384xf32>
    %57 = arith.mulf %29, %56 : vector<8x384xf32>
    %58 = arith.maximumf %52, %57 : vector<8x384xf32>
    %c8_29 = arith.constant 8 : index
    %c20 = arith.constant 20 : index
    %59 = vector.load %arg5[%c8_29, %c20] : memref<24x512xf32, #tpu.memory_space<vmem>>, vector<8x384xf32>
    %60 = vector.extract_strided_slice %28 {offsets = [0, 5], sizes = [8, 1], strides = [1, 1]} : vector<8x9xf32> to vector<8x1xf32>
    %61 = vector.broadcast %60 : vector<8x1xf32> to vector<8x384xf32>
    %62 = arith.addf %59, %61 : vector<8x384xf32>
    %63 = arith.mulf %29, %62 : vector<8x384xf32>
    %64 = arith.maximumf %58, %63 : vector<8x384xf32>
    %c8_30 = arith.constant 8 : index
    %c36 = arith.constant 36 : index
    %65 = vector.load %arg5[%c8_30, %c36] : memref<24x512xf32, #tpu.memory_space<vmem>>, vector<8x384xf32>
    %66 = vector.extract_strided_slice %28 {offsets = [0, 6], sizes = [8, 1], strides = [1, 1]} : vector<8x9xf32> to vector<8x1xf32>
    %67 = vector.broadcast %66 : vector<8x1xf32> to vector<8x384xf32>
    %68 = arith.addf %65, %67 : vector<8x384xf32>
    %69 = arith.mulf %29, %68 : vector<8x384xf32>
    %70 = arith.maximumf %64, %69 : vector<8x384xf32>
    %c8_31 = arith.constant 8 : index
    %c37 = arith.constant 37 : index
    %71 = vector.load %arg5[%c8_31, %c37] : memref<24x512xf32, #tpu.memory_space<vmem>>, vector<8x384xf32>
    %72 = vector.extract_strided_slice %28 {offsets = [0, 7], sizes = [8, 1], strides = [1, 1]} : vector<8x9xf32> to vector<8x1xf32>
    %73 = vector.broadcast %72 : vector<8x1xf32> to vector<8x384xf32>
    %74 = arith.addf %71, %73 : vector<8x384xf32>
    %75 = arith.mulf %29, %74 : vector<8x384xf32>
    %76 = arith.maximumf %70, %75 : vector<8x384xf32>
    %c8_32 = arith.constant 8 : index
    %c38 = arith.constant 38 : index
    %77 = vector.load %arg5[%c8_32, %c38] : memref<24x512xf32, #tpu.memory_space<vmem>>, vector<8x384xf32>
    %78 = vector.extract_strided_slice %28 {offsets = [0, 8], sizes = [8, 1], strides = [1, 1]} : vector<8x9xf32> to vector<8x1xf32>
    %79 = vector.broadcast %78 : vector<8x1xf32> to vector<8x384xf32>
    %80 = arith.addf %77, %79 : vector<8x384xf32>
    %81 = arith.mulf %29, %80 : vector<8x384xf32>
    %82 = arith.maximumf %76, %81 : vector<8x384xf32>
    %c8_33 = arith.constant 8 : index
    %c0_34 = arith.constant 0 : index
    %83 = vector.load %arg5[%c8_33, %c0_34] : memref<24x512xf32, #tpu.memory_space<vmem>>, vector<8x384xf32>
    %84 = vector.extract_strided_slice %28 {offsets = [0, 0], sizes = [8, 1], strides = [1, 1]} : vector<8x9xf32> to vector<8x1xf32>
    %85 = vector.broadcast %84 : vector<8x1xf32> to vector<8x384xf32>
    %86 = arith.addf %83, %85 : vector<8x384xf32>
    %87 = arith.mulf %29, %86 : vector<8x384xf32>
    %88 = arith.subf %87, %82 : vector<8x384xf32>
    %89 = math.exp %88 : vector<8x384xf32>
    %c16 = arith.constant 16 : index
    %c0_35 = arith.constant 0 : index
    %90 = vector.load %arg5[%c16, %c0_35] : memref<24x512xf32, #tpu.memory_space<vmem>>, vector<8x384xf32>
    %91 = arith.mulf %89, %90 : vector<8x384xf32>
    %c8_36 = arith.constant 8 : index
    %c1_37 = arith.constant 1 : index
    %92 = vector.load %arg5[%c8_36, %c1_37] : memref<24x512xf32, #tpu.memory_space<vmem>>, vector<8x384xf32>
    %93 = vector.extract_strided_slice %28 {offsets = [0, 1], sizes = [8, 1], strides = [1, 1]} : vector<8x9xf32> to vector<8x1xf32>
    %94 = vector.broadcast %93 : vector<8x1xf32> to vector<8x384xf32>
    %95 = arith.addf %92, %94 : vector<8x384xf32>
    %96 = arith.mulf %29, %95 : vector<8x384xf32>
    %97 = arith.subf %96, %82 : vector<8x384xf32>
    %98 = math.exp %97 : vector<8x384xf32>
    %c16_38 = arith.constant 16 : index
    %c1_39 = arith.constant 1 : index
    %99 = vector.load %arg5[%c16_38, %c1_39] : memref<24x512xf32, #tpu.memory_space<vmem>>, vector<8x384xf32>
    %100 = arith.mulf %98, %99 : vector<8x384xf32>
    %101 = arith.addf %89, %98 : vector<8x384xf32>
    %102 = arith.addf %91, %100 : vector<8x384xf32>
    %c8_40 = arith.constant 8 : index
    %c2_41 = arith.constant 2 : index
    %103 = vector.load %arg5[%c8_40, %c2_41] : memref<24x512xf32, #tpu.memory_space<vmem>>, vector<8x384xf32>
    %104 = vector.extract_strided_slice %28 {offsets = [0, 2], sizes = [8, 1], strides = [1, 1]} : vector<8x9xf32> to vector<8x1xf32>
    %105 = vector.broadcast %104 : vector<8x1xf32> to vector<8x384xf32>
    %106 = arith.addf %103, %105 : vector<8x384xf32>
    %107 = arith.mulf %29, %106 : vector<8x384xf32>
    %108 = arith.subf %107, %82 : vector<8x384xf32>
    %109 = math.exp %108 : vector<8x384xf32>
    %c16_42 = arith.constant 16 : index
    %c2_43 = arith.constant 2 : index
    %110 = vector.load %arg5[%c16_42, %c2_43] : memref<24x512xf32, #tpu.memory_space<vmem>>, vector<8x384xf32>
    %111 = arith.mulf %109, %110 : vector<8x384xf32>
    %112 = arith.addf %101, %109 : vector<8x384xf32>
    %113 = arith.addf %102, %111 : vector<8x384xf32>
    %c8_44 = arith.constant 8 : index
    %c18_45 = arith.constant 18 : index
    %114 = vector.load %arg5[%c8_44, %c18_45] : memref<24x512xf32, #tpu.memory_space<vmem>>, vector<8x384xf32>
    %115 = vector.extract_strided_slice %28 {offsets = [0, 3], sizes = [8, 1], strides = [1, 1]} : vector<8x9xf32> to vector<8x1xf32>
    %116 = vector.broadcast %115 : vector<8x1xf32> to vector<8x384xf32>
    %117 = arith.addf %114, %116 : vector<8x384xf32>
    %118 = arith.mulf %29, %117 : vector<8x384xf32>
    %119 = arith.subf %118, %82 : vector<8x384xf32>
    %120 = math.exp %119 : vector<8x384xf32>
    %c16_46 = arith.constant 16 : index
    %c18_47 = arith.constant 18 : index
    %121 = vector.load %arg5[%c16_46, %c18_47] : memref<24x512xf32, #tpu.memory_space<vmem>>, vector<8x384xf32>
    %122 = arith.mulf %120, %121 : vector<8x384xf32>
    %123 = arith.addf %112, %120 : vector<8x384xf32>
    %124 = arith.addf %113, %122 : vector<8x384xf32>
    %c8_48 = arith.constant 8 : index
    %c19_49 = arith.constant 19 : index
    %125 = vector.load %arg5[%c8_48, %c19_49] : memref<24x512xf32, #tpu.memory_space<vmem>>, vector<8x384xf32>
    %126 = vector.extract_strided_slice %28 {offsets = [0, 4], sizes = [8, 1], strides = [1, 1]} : vector<8x9xf32> to vector<8x1xf32>
    %127 = vector.broadcast %126 : vector<8x1xf32> to vector<8x384xf32>
    %128 = arith.addf %125, %127 : vector<8x384xf32>
    %129 = arith.mulf %29, %128 : vector<8x384xf32>
    %130 = arith.subf %129, %82 : vector<8x384xf32>
    %131 = math.exp %130 : vector<8x384xf32>
    %c16_50 = arith.constant 16 : index
    %c19_51 = arith.constant 19 : index
    %132 = vector.load %arg5[%c16_50, %c19_51] : memref<24x512xf32, #tpu.memory_space<vmem>>, vector<8x384xf32>
    %133 = arith.mulf %131, %132 : vector<8x384xf32>
    %134 = arith.addf %123, %131 : vector<8x384xf32>
    %135 = arith.addf %124, %133 : vector<8x384xf32>
    %c8_52 = arith.constant 8 : index
    %c20_53 = arith.constant 20 : index
    %136 = vector.load %arg5[%c8_52, %c20_53] : memref<24x512xf32, #tpu.memory_space<vmem>>, vector<8x384xf32>
    %137 = vector.extract_strided_slice %28 {offsets = [0, 5], sizes = [8, 1], strides = [1, 1]} : vector<8x9xf32> to vector<8x1xf32>
    %138 = vector.broadcast %137 : vector<8x1xf32> to vector<8x384xf32>
    %139 = arith.addf %136, %138 : vector<8x384xf32>
    %140 = arith.mulf %29, %139 : vector<8x384xf32>
    %141 = arith.subf %140, %82 : vector<8x384xf32>
    %142 = math.exp %141 : vector<8x384xf32>
    %c16_54 = arith.constant 16 : index
    %c20_55 = arith.constant 20 : index
    %143 = vector.load %arg5[%c16_54, %c20_55] : memref<24x512xf32, #tpu.memory_space<vmem>>, vector<8x384xf32>
    %144 = arith.mulf %142, %143 : vector<8x384xf32>
    %145 = arith.addf %134, %142 : vector<8x384xf32>
    %146 = arith.addf %135, %144 : vector<8x384xf32>
    %c8_56 = arith.constant 8 : index
    %c36_57 = arith.constant 36 : index
    %147 = vector.load %arg5[%c8_56, %c36_57] : memref<24x512xf32, #tpu.memory_space<vmem>>, vector<8x384xf32>
    %148 = vector.extract_strided_slice %28 {offsets = [0, 6], sizes = [8, 1], strides = [1, 1]} : vector<8x9xf32> to vector<8x1xf32>
    %149 = vector.broadcast %148 : vector<8x1xf32> to vector<8x384xf32>
    %150 = arith.addf %147, %149 : vector<8x384xf32>
    %151 = arith.mulf %29, %150 : vector<8x384xf32>
    %152 = arith.subf %151, %82 : vector<8x384xf32>
    %153 = math.exp %152 : vector<8x384xf32>
    %c16_58 = arith.constant 16 : index
    %c36_59 = arith.constant 36 : index
    %154 = vector.load %arg5[%c16_58, %c36_59] : memref<24x512xf32, #tpu.memory_space<vmem>>, vector<8x384xf32>
    %155 = arith.mulf %153, %154 : vector<8x384xf32>
    %156 = arith.addf %145, %153 : vector<8x384xf32>
    %157 = arith.addf %146, %155 : vector<8x384xf32>
    %c8_60 = arith.constant 8 : index
    %c37_61 = arith.constant 37 : index
    %158 = vector.load %arg5[%c8_60, %c37_61] : memref<24x512xf32, #tpu.memory_space<vmem>>, vector<8x384xf32>
    %159 = vector.extract_strided_slice %28 {offsets = [0, 7], sizes = [8, 1], strides = [1, 1]} : vector<8x9xf32> to vector<8x1xf32>
    %160 = vector.broadcast %159 : vector<8x1xf32> to vector<8x384xf32>
    %161 = arith.addf %158, %160 : vector<8x384xf32>
    %162 = arith.mulf %29, %161 : vector<8x384xf32>
    %163 = arith.subf %162, %82 : vector<8x384xf32>
    %164 = math.exp %163 : vector<8x384xf32>
    %c16_62 = arith.constant 16 : index
    %c37_63 = arith.constant 37 : index
    %165 = vector.load %arg5[%c16_62, %c37_63] : memref<24x512xf32, #tpu.memory_space<vmem>>, vector<8x384xf32>
    %166 = arith.mulf %164, %165 : vector<8x384xf32>
    %167 = arith.addf %156, %164 : vector<8x384xf32>
    %168 = arith.addf %157, %166 : vector<8x384xf32>
    %c8_64 = arith.constant 8 : index
    %c38_65 = arith.constant 38 : index
    %169 = vector.load %arg5[%c8_64, %c38_65] : memref<24x512xf32, #tpu.memory_space<vmem>>, vector<8x384xf32>
    %170 = vector.extract_strided_slice %28 {offsets = [0, 8], sizes = [8, 1], strides = [1, 1]} : vector<8x9xf32> to vector<8x1xf32>
    %171 = vector.broadcast %170 : vector<8x1xf32> to vector<8x384xf32>
    %172 = arith.addf %169, %171 : vector<8x384xf32>
    %173 = arith.mulf %29, %172 : vector<8x384xf32>
    %174 = arith.subf %173, %82 : vector<8x384xf32>
    %175 = math.exp %174 : vector<8x384xf32>
    %c16_66 = arith.constant 16 : index
    %c38_67 = arith.constant 38 : index
    %176 = vector.load %arg5[%c16_66, %c38_67] : memref<24x512xf32, #tpu.memory_space<vmem>>, vector<8x384xf32>
    %177 = arith.mulf %175, %176 : vector<8x384xf32>
    %178 = arith.addf %167, %175 : vector<8x384xf32>
    %179 = arith.addf %168, %177 : vector<8x384xf32>
    %180 = tpu.reciprocal %178 : vector<8x384xf32> -> vector<8x384xf32>
    %181 = arith.mulf %179, %180 : vector<8x384xf32>
    %c0_68 = arith.constant 0 : index
    %c0_69 = arith.constant 0 : index
    %c0_70 = arith.constant 0 : index
    %182 = vector.load %arg4[%c0_68, %c0_69, %c0_70] : memref<1x8x384xf32, #tpu.memory_space<vmem>>, vector<1x8x384xf32>
    %183 = vector.shape_cast %182 : vector<1x8x384xf32> to vector<8x384xf32>
    %184 = vector.shape_cast %181 : vector<8x384xf32> to vector<1x8x384xf32>
    tpu.vector_store %arg4[%c0_68, %c0_69, %c0_70], %184 {strides = array<i32>} : memref<1x8x384xf32, #tpu.memory_space<vmem>>, vector<1x8x384xf32>,
    return
  }
  func.func @transform_0(%arg0: i32) -> (i32, i32, i32) {
    %c0_i32 = arith.constant 0 : i32
    %c0_i32_0 = arith.constant 0 : i32
    %c0_i32_1 = arith.constant 0 : i32
    return %arg0, %c0_i32, %c0_i32_0 : i32, i32, i32
  }
  func.func @transform_1(%arg0: i32) -> (i32, i32) {
    %c0_i32 = arith.constant 0 : i32
    %c0_i32_0 = arith.constant 0 : i32
    %c0_i32_1 = arith.constant 0 : i32
    return %c0_i32, %c0_i32_0 : i32, i32
  }
  func.func @transform_2(%arg0: i32) -> (i32, i32) {
    %c0_i32 = arith.constant 0 : i32
    %c0_i32_0 = arith.constant 0 : i32
    %c0_i32_1 = arith.constant 0 : i32
    return %c0_i32, %c0_i32_0 : i32, i32
  }
  func.func @transform_3(%arg0: i32) -> (i32, i32, i32) {
    %c0_i32 = arith.constant 0 : i32
    %c0_i32_0 = arith.constant 0 : i32
    %c0_i32_1 = arith.constant 0 : i32
    return %arg0, %c0_i32, %c0_i32_0 : i32, i32, i32
  }
}

</mosaic_0001>

<llo_original>
// kernel: tpu_custom_call.1
$region0: #{tpu_custom_call.1}
  #allocation0 [shape = 'u32[]', space=smem, size = 0x4, offset = 0x4, fixed_abs, tag = 'smem constant byte address 0x4 - core index']
  #allocation1 [shape = 'u32[144,128]{1,0:T(1,128)}', space=vmem, size = 0x12000, scoped, tag = 'internal scratch']
  #allocation2 [shape = 'f32[24,512]{1,0:T(8,128)}', space=vmem, size = 0xc000, scoped, tag = 'scratch operand']
  %s0 = inlined_call_operand.hbm [shape: f32[2,8,512], index: 0, kind: input, shape index: {}]
  %s1 = inlined_call_operand.vmem [shape: f32[24,8], index: 1, kind: input, shape index: {}]
  %s2 = inlined_call_operand.vmem [shape: f32[8,9], index: 2, kind: input, shape index: {}]
  %s3 = inlined_call_operand.hbm [shape: f32[2,8,384], index: 3, kind: output, shape index: {}]
  %s4 = sld [smem:[#allocation0]]
  $region49: #{tpu_custom_call.1} parent=0
    _
  %s6 = ssub.s32 1, %s4
  %s7 = scalar_select 0, %s6, %s4
  $region1: #{tpu_custom_call.1} parent=0
    #allocation3 [shape = 'u8[32768]{0}', space=vmem, size = 0x8000, scoped, tag = 'input window, operand 0']
    #allocation4 [shape = 's32[2]{0}', space=sflag, size = 0x8, scoped, tag = 'scoped memory for tpu_custom_call.1']
    #allocation5 [shape = 's32[2]{0}', space=sflag, size = 0x8, scoped, tag = 'scoped memory for tpu_custom_call.1']
    #allocation6 [shape = 'u8[24576]{0}', space=vmem, size = 0x6000, scoped, tag = 'output window, operand 0']
    %8 = vsyncpa [#allocation4], 0
    %s9 = scalar_lea.sflag [#allocation4], 1
    %10 = vsyncpa %s9, 0
    %11 = vsyncpa [#allocation5], 0
    %s12 = scalar_lea.sflag [#allocation5], 1
    %13 = vsyncpa %s12, 0
    loop: start=0, step=1, limit=4
    $region2: #{tpu_custom_call.1} parent=1 // loop_pre_header
      _
    $region3: #{tpu_custom_call.1} parent=1 // loop_header
      %s15 = sphi 0, %s19
      %p16 = scmp.ge.s32.totalorder %s15, 4
      %s25 = sphi 0, %s27
      %s28 = sphi 0, %s25
      %s29 = sphi 0, %s28
      %s45 = sphi 0, %s29
      %s49 = sphi 0, %s49
      %s51 = sphi 0, %s49
      %s52 = sphi 0, %s51
      %s66 = sphi 0, %s52
      %s70 = sphi 0, %s70
      %s72 = sphi 0, %s70
      %s73 = sphi 0, %s72
      %s87 = sphi 0, %s73
      %s93 = sphi 0, %s95
      %s96 = sphi 0, %s93
      %s97 = sphi 0, %s96
      %s113 = sphi 0, %s97
    $region4: #{tpu_custom_call.1} parent=1 // loop_header_branch
      %18 = sbr.rel (%p16) target = $region8
    $region5: #{tpu_custom_call.1} parent=1 // loop_body
      %s20 = ssub.s32 %s15, 1
      %s21 = ssub.s32 %s15, 2
      %s22 = sadd.s32 %s15, 1
      %s23 = ssub.s32 %s15, %s22
      %p24 = scmp.eq.s32.totalorder %s23, 0
      %s26 = sadd.s32 %s25, 1
      %s27 = scalar_select %p24, %s25, %s26
      %p30 = pneg %p24
      %p31 = scmp.eq.s32.totalorder %s15, 1
      %p32 = por %p30, %p31
      %p33 = scmp.ne.s32.totalorder %s25, %s28
      %p34 = scmp.eq.s32.totalorder %s15, 0
      %p35 = por %p33, %p34
      %p36 = scmp.ne.s32.totalorder %s25, %s28
      %p37 = scmp.eq.s32.totalorder %s20, 1
      %p38 = por %p36, %p37
      %p39 = scmp.ne.s32.totalorder %s28, %s29
      %p40 = scmp.eq.s32.totalorder %s20, 0
      %p41 = por %p39, %p40
      %p42 = scmp.ne.s32.totalorder %s28, %s29
      %p43 = scmp.eq.s32.totalorder %s21, 1
      %p44 = por %p42, %p43
      %p46 = scmp.ne.s32.totalorder %s29, %s45
      %p47 = scmp.eq.s32.totalorder %s21, 0
      %p48 = por %p46, %p47
      %s50 = sadd.s32 %s49, 1
      %p53 = scmp.eq.s32.totalorder %s15, 1
      %p54 = scmp.ne.s32.totalorder %s49, %s51
      %p55 = scmp.eq.s32.totalorder %s15, 0
      %p56 = por %p54, %p55
      %p57 = scmp.ne.s32.totalorder %s49, %s51
      %p58 = scmp.eq.s32.totalorder %s20, 1
      %p59 = por %p57, %p58
      %p60 = scmp.ne.s32.totalorder %s51, %s52
      %p61 = scmp.eq.s32.totalorder %s20, 0
      %p62 = por %p60, %p61
      %p63 = scmp.ne.s32.totalorder %s51, %s52
      %p64 = scmp.eq.s32.totalorder %s21, 1
      %p65 = por %p63, %p64
      %p67 = scmp.ne.s32.totalorder %s52, %s66
      %p68 = scmp.eq.s32.totalorder %s21, 0
      %p69 = por %p67, %p68
      %s71 = sadd.s32 %s70, 1
      %p74 = scmp.eq.s32.totalorder %s15, 1
      %p75 = scmp.ne.s32.totalorder %s70, %s72
      %p76 = scmp.eq.s32.totalorder %s15, 0
      %p77 = por %p75, %p76
      %p78 = scmp.ne.s32.totalorder %s70, %s72
      %p79 = scmp.eq.s32.totalorder %s20, 1
      %p80 = por %p78, %p79
      %p81 = scmp.ne.s32.totalorder %s72, %s73
      %p82 = scmp.eq.s32.totalorder %s20, 0
      %p83 = por %p81, %p82
      %p84 = scmp.ne.s32.totalorder %s72, %s73
      %p85 = scmp.eq.s32.totalorder %s21, 1
      %p86 = por %p84, %p85
      %p88 = scmp.ne.s32.totalorder %s73, %s87
      %p89 = scmp.eq.s32.totalorder %s21, 0
      %p90 = por %p88, %p89
      %s91 = ssub.s32 %s15, %s22
      %p92 = scmp.eq.s32.totalorder %s91, 0
      %s94 = sadd.s32 %s93, 1
      %s95 = scalar_select %p92, %s93, %s94
      %p98 = pneg %p92
      %p99 = scmp.eq.s32.totalorder %s15, 1
      %p100 = por %p98, %p99
      %p101 = scmp.ne.s32.totalorder %s93, %s96
      %p102 = scmp.eq.s32.totalorder %s15, 0
      %p103 = por %p101, %p102
      %p104 = scmp.ne.s32.totalorder %s93, %s96
      %p105 = scmp.eq.s32.totalorder %s20, 1
      %p106 = por %p104, %p105
      %p107 = scmp.ne.s32.totalorder %s96, %s97
      %p108 = scmp.eq.s32.totalorder %s20, 0
      %p109 = por %p107, %p108
      %p110 = scmp.ne.s32.totalorder %s96, %s97
      %p111 = scmp.eq.s32.totalorder %s21, 1
      %p112 = por %p110, %p111
      %p114 = scmp.ne.s32.totalorder %s97, %s113
      %p115 = scmp.eq.s32.totalorder %s21, 0
      %p116 = por %p114, %p115
      %p117 = scmp.le.s32.totalorder 1, %s15
      %p118 = scmp.lt.s32.totalorder %s15, 3
      %p119 = pnand %p117, %p118
      %p120 = pneg %p119
      // Predicated region
      $region9: #{tpu_custom_call.1} parent=5 // pred_check
        _
      $region10: #{tpu_custom_call.1} parent=5 // pred_check_branch
        %122 = sbr.rel (%p119) target = $region12
      $region11: #{tpu_custom_call.1} parent=5 // pred_region
        %s123 = ssub.s32 %s15, 1
        // Predicated region
        $region13: #{tpu_custom_call.1} parent=11 // pred_check
          %p124 = pneg %p62
        $region14: #{tpu_custom_call.1} parent=11 // pred_check_branch
          %126 = sbr.rel (%p124) target = $region16
        $region15: #{tpu_custom_call.1} parent=11 // pred_region
          _
        $region16: #{tpu_custom_call.1} parent=11 // pred_fallthru
          _
        // Predicated region
        $region17: #{tpu_custom_call.1} parent=11 // pred_check
          %p127 = pneg %p83
        $region18: #{tpu_custom_call.1} parent=11 // pred_check_branch
          %129 = sbr.rel (%p127) target = $region20
        $region19: #{tpu_custom_call.1} parent=11 // pred_region
          _
        $region20: #{tpu_custom_call.1} parent=11 // pred_fallthru
          _
      $region12: #{tpu_custom_call.1} parent=5 // pred_fallthru
        _
      %p130 = scmp.lt.s32.totalorder %s15, 2
      // Predicated region
      $region21: #{tpu_custom_call.1} parent=5 // pred_check
        %p131 = pneg %p130
      $region22: #{tpu_custom_call.1} parent=5 // pred_check_branch
        %133 = sbr.rel (%p131) target = $region24
      $region23: #{tpu_custom_call.1} parent=5 // pred_region
        // Predicated region
        $region25: #{tpu_custom_call.1} parent=23 // pred_check
          %p134 = pneg %p35
        $region26: #{tpu_custom_call.1} parent=23 // pred_check_branch
          %136 = sbr.rel (%p134) target = $region28
        $region27: #{tpu_custom_call.1} parent=23 // pred_region
          %s137 = sand.u32 %s25, 1
          %s138 = scalar_lea.sflag [#allocation4], %s137
          %s139 = sand.u32 %s25, 1
          %s140 = smul.addr %s139, 32
          %s141 = scalar_lea.vmem [#allocation3], %s140
          %s143 = ssub.s32 512, 512
          %144 = vsyncadd %s138, %s143
          %s145 = smul.addr %s15, 4
          %s146 = smul.addr %s145, 128
          %s147 = scalar_lea.hbm %s0, %s146
          %s149 = sshll.u32 %s141, 4
          %s150 = int_to_ptr.vmem [resolvable:$true] %s149
          %152 = dma.hbm_to_vmem [thread:$0]  %s147, 512, %s150, %s138
        $region28: #{tpu_custom_call.1} parent=23 // pred_fallthru
          _
      $region24: #{tpu_custom_call.1} parent=5 // pred_fallthru
        _
      %p153 = scmp.le.s32.totalorder 1, %s15
      %p154 = scmp.lt.s32.totalorder %s15, 3
      %p155 = pnand %p153, %p154
      %p156 = pneg %p155
      // Predicated region
      $region29: #{tpu_custom_call.1} parent=5 // pred_check
        _
      $region30: #{tpu_custom_call.1} parent=5 // pred_check_branch
        %158 = sbr.rel (%p155) target = $region32
      $region31: #{tpu_custom_call.1} parent=5 // pred_region
        %s159 = ssub.s32 %s15, 1
        %s160 = sand.u32 %s28, 1
        %s161 = scalar_lea.sflag [#allocation4], %s160
        %s162 = sand.u32 %s28, 1
        %s163 = smul.addr %s162, 32
        %s164 = scalar_lea.vmem [#allocation3], %s163
        // Predicated region
        $region33: #{tpu_custom_call.1} parent=31 // pred_check
          %p165 = pneg %p41
        $region34: #{tpu_custom_call.1} parent=31 // pred_check_branch
          %167 = sbr.rel (%p165) target = $region36
        $region35: #{tpu_custom_call.1} parent=31 // pred_region
          %168 = dma.done %s161, 512
        $region36: #{tpu_custom_call.1} parent=31 // pred_fallthru
          _
        %s169 = sand.u32 %s28, 1
        %s170 = scalar_lea.sflag [#allocation4], %s169
        %s171 = sand.u32 %s28, 1
        %s172 = smul.addr %s171, 32
        %s173 = scalar_lea.vmem [#allocation3], %s172
        %p174 = pneg %p41
        %p175 = pneg %p38
        %p176 = pneg %p62
        %p177 = pneg %p59
        %p178 = pneg %p83
        %p179 = pneg %p80
        %p180 = pneg %p109
        %p181 = pneg %p106
        %s182 = sand.u32 %s96, 1
        %s183 = scalar_lea.sflag [#allocation5], %s182
        %s184 = sand.u32 %s96, 1
        %s185 = smul.addr %s184, 24
        %s186 = scalar_lea.vmem [#allocation6], %s185
        %v187 = vld [vmem:[%s1] sm:$0xff]
        %v188 = vld [vmem:[%s1 + $0x8] sm:$0xff]
        %v189 = vld [vmem:[%s1 + $0x10] sm:$0xff]
        %v190 = vld [vmem:[%s164] ss:$8 sm:$0xf]
        %192 = vset.pattern.permute.xlu0 0
        %193 = vperm.xlu0 %192, %v187
        %v194 = vpop.permute.xlu0 %193
        %197 = vset.pattern.permute.xlu0 0
        %198 = vperm.xlu0 %197, %v188
        %v199 = vpop.permute.xlu0 %198
        %202 = vset.pattern.permute.xlu0 0
        %203 = vperm.xlu0 %202, %v189
        %v204 = vpop.permute.xlu0 %203
        %v207 = vlaneseq
        %v208 = vshrl.u32 %v207, 7
        %v209 = vsub.s32 0, %v208
        %v210 = vrot.slane %v190, %v209
        %v211 = vlaneseq
        %v212 = vshrl.u32 %v211, 7
        %v213 = vsub.s32 1, %v212
        %v214 = vrot.slane %v190, %v213
        %v215 = vlaneseq
        %v216 = vshrl.u32 %v215, 7
        %v217 = vsub.s32 2, %v216
        %v218 = vrot.slane %v190, %v217
        %v219 = vlaneseq
        %v220 = vshrl.u32 %v219, 7
        %v221 = vsub.s32 3, %v220
        %v222 = vrot.slane %v190, %v221
        %v227 = vmul.f32 %v194, %v210
        %v228 = vmul.f32 %v194, %v214
        %v229 = vmul.f32 %v194, %v218
        %v230 = vmul.f32 %v194, %v222
        %v231 = vmul.f32 %v199, %v210
        %v232 = vmul.f32 %v199, %v214
        %v233 = vmul.f32 %v199, %v218
        %v234 = vmul.f32 %v199, %v222
        %v235 = vmul.f32 %v204, %v210
        %v236 = vmul.f32 %v204, %v214
        %v237 = vmul.f32 %v204, %v218
        %v238 = vmul.f32 %v204, %v222
        %s239 = scalar_lea.vmem %s164, 1 [#allocation3]
        %v240 = vld [vmem:[%s239] ss:$8 sm:$0xf]
        %241 = vset.pattern.permute.xlu0 1
        %242 = vperm.xlu0 %241, %v187
        %v243 = vpop.permute.xlu0 %242
        %245 = vset.pattern.permute.xlu0 1
        %246 = vperm.xlu0 %245, %v188
        %v247 = vpop.permute.xlu0 %246
        %249 = vset.pattern.permute.xlu0 1
        %250 = vperm.xlu0 %249, %v189
        %v251 = vpop.permute.xlu0 %250
        %v254 = vlaneseq
        %v255 = vshrl.u32 %v254, 7
        %v256 = vsub.s32 0, %v255
        %v257 = vrot.slane %v240, %v256
        %v258 = vlaneseq
        %v259 = vshrl.u32 %v258, 7
        %v260 = vsub.s32 1, %v259
        %v261 = vrot.slane %v240, %v260
        %v262 = vlaneseq
        %v263 = vshrl.u32 %v262, 7
        %v264 = vsub.s32 2, %v263
        %v265 = vrot.slane %v240, %v264
        %v266 = vlaneseq
        %v267 = vshrl.u32 %v266, 7
        %v268 = vsub.s32 3, %v267
        %v269 = vrot.slane %v240, %v268
        %v274 = vmul.f32 %v243, %v257
        %v275 = vmul.f32 %v243, %v261
        %v276 = vmul.f32 %v243, %v265
        %v277 = vmul.f32 %v243, %v269
        %v278 = vmul.f32 %v247, %v257
        %v279 = vmul.f32 %v247, %v261
        %v280 = vmul.f32 %v247, %v265
        %v281 = vmul.f32 %v247, %v269
        %v282 = vmul.f32 %v251, %v257
        %v283 = vmul.f32 %v251, %v261
        %v284 = vmul.f32 %v251, %v265
        %v285 = vmul.f32 %v251, %v269
        %v286 = vadd.f32 %v227, %v274
        %v287 = vadd.f32 %v228, %v275
        %v288 = vadd.f32 %v229, %v276
        %v289 = vadd.f32 %v230, %v277
        %v290 = vadd.f32 %v231, %v278
        %v291 = vadd.f32 %v232, %v279
        %v292 = vadd.f32 %v233, %v280
        %v293 = vadd.f32 %v234, %v281
        %v294 = vadd.f32 %v235, %v282
        %v295 = vadd.f32 %v236, %v283
        %v296 = vadd.f32 %v237, %v284
        %v297 = vadd.f32 %v238, %v285
        %s298 = scalar_lea.vmem %s164, 2 [#allocation3]
        %v299 = vld [vmem:[%s298] ss:$8 sm:$0xf]
        %300 = vset.pattern.permute.xlu0 2
        %301 = vperm.xlu0 %300, %v187
        %v302 = vpop.permute.xlu0 %301
        %304 = vset.pattern.permute.xlu0 2
        %305 = vperm.xlu0 %304, %v188
        %v306 = vpop.permute.xlu0 %305
        %308 = vset.pattern.permute.xlu0 2
        %309 = vperm.xlu0 %308, %v189
        %v310 = vpop.permute.xlu0 %309
        %v313 = vlaneseq
        %v314 = vshrl.u32 %v313, 7
        %v315 = vsub.s32 0, %v314
        %v316 = vrot.slane %v299, %v315
        %v317 = vlaneseq
        %v318 = vshrl.u32 %v317, 7
        %v319 = vsub.s32 1, %v318
        %v320 = vrot.slane %v299, %v319
        %v321 = vlaneseq
        %v322 = vshrl.u32 %v321, 7
        %v323 = vsub.s32 2, %v322
        %v324 = vrot.slane %v299, %v323
        %v325 = vlaneseq
        %v326 = vshrl.u32 %v325, 7
        %v327 = vsub.s32 3, %v326
        %v328 = vrot.slane %v299, %v327
        %v333 = vmul.f32 %v302, %v316
        %v334 = vmul.f32 %v302, %v320
        %v335 = vmul.f32 %v302, %v324
        %v336 = vmul.f32 %v302, %v328
        %v337 = vmul.f32 %v306, %v316
        %v338 = vmul.f32 %v306, %v320
        %v339 = vmul.f32 %v306, %v324
        %v340 = vmul.f32 %v306, %v328
        %v341 = vmul.f32 %v310, %v316
        %v342 = vmul.f32 %v310, %v320
        %v343 = vmul.f32 %v310, %v324
        %v344 = vmul.f32 %v310, %v328
        %v345 = vadd.f32 %v286, %v333
        %v346 = vadd.f32 %v287, %v334
        %v347 = vadd.f32 %v288, %v335
        %v348 = vadd.f32 %v289, %v336
        %v349 = vadd.f32 %v290, %v337
        %v350 = vadd.f32 %v291, %v338
        %v351 = vadd.f32 %v292, %v339
        %v352 = vadd.f32 %v293, %v340
        %v353 = vadd.f32 %v294, %v341
        %v354 = vadd.f32 %v295, %v342
        %v355 = vadd.f32 %v296, %v343
        %v356 = vadd.f32 %v297, %v344
        %s357 = scalar_lea.vmem %s164, 3 [#allocation3]
        %v358 = vld [vmem:[%s357] ss:$8 sm:$0xf]
        %359 = vset.pattern.permute.xlu0 3
        %360 = vperm.xlu0 %359, %v187
        %v361 = vpop.permute.xlu0 %360
        %363 = vset.pattern.permute.xlu0 3
        %364 = vperm.xlu0 %363, %v188
        %v365 = vpop.permute.xlu0 %364
        %367 = vset.pattern.permute.xlu0 3
        %368 = vperm.xlu0 %367, %v189
        %v369 = vpop.permute.xlu0 %368
        %v372 = vlaneseq
        %v373 = vshrl.u32 %v372, 7
        %v374 = vsub.s32 0, %v373
        %v375 = vrot.slane %v358, %v374
        %v376 = vlaneseq
        %v377 = vshrl.u32 %v376, 7
        %v378 = vsub.s32 1, %v377
        %v379 = vrot.slane %v358, %v378
        %v380 = vlaneseq
        %v381 = vshrl.u32 %v380, 7
        %v382 = vsub.s32 2, %v381
        %v383 = vrot.slane %v358, %v382
        %v384 = vlaneseq
        %v385 = vshrl.u32 %v384, 7
        %v386 = vsub.s32 3, %v385
        %v387 = vrot.slane %v358, %v386
        %v392 = vmul.f32 %v361, %v375
        %v393 = vmul.f32 %v361, %v379
        %v394 = vmul.f32 %v361, %v383
        %v395 = vmul.f32 %v361, %v387
        %v396 = vmul.f32 %v365, %v375
        %v397 = vmul.f32 %v365, %v379
        %v398 = vmul.f32 %v365, %v383
        %v399 = vmul.f32 %v365, %v387
        %v400 = vmul.f32 %v369, %v375
        %v401 = vmul.f32 %v369, %v379
        %v402 = vmul.f32 %v369, %v383
        %v403 = vmul.f32 %v369, %v387
        %v404 = vadd.f32 %v345, %v392
        %v405 = vadd.f32 %v346, %v393
        %v406 = vadd.f32 %v347, %v394
        %v407 = vadd.f32 %v348, %v395
        %v408 = vadd.f32 %v349, %v396
        %v409 = vadd.f32 %v350, %v397
        %v410 = vadd.f32 %v351, %v398
        %v411 = vadd.f32 %v352, %v399
        %v412 = vadd.f32 %v353, %v400
        %v413 = vadd.f32 %v354, %v401
        %v414 = vadd.f32 %v355, %v402
        %v415 = vadd.f32 %v356, %v403
        %416 = vst [vmem:[#allocation2] sm:$0xff] %v404
        %417 = vst [vmem:[#allocation2 + $0x8] sm:$0xff] %v405
        %418 = vst [vmem:[#allocation2 + $0x10] sm:$0xff] %v406
        %419 = vst [vmem:[#allocation2 + $0x18] sm:$0xff] %v407
        %420 = vst [vmem:[#allocation2 + $0x20] sm:$0xff] %v408
        %421 = vst [vmem:[#allocation2 + $0x28] sm:$0xff] %v409
        %422 = vst [vmem:[#allocation2 + $0x30] sm:$0xff] %v410
        %423 = vst [vmem:[#allocation2 + $0x38] sm:$0xff] %v411
        %424 = vst [vmem:[#allocation2 + $0x40] sm:$0xff] %v412
        %425 = vst [vmem:[#allocation2 + $0x48] sm:$0xff] %v413
        %426 = vst [vmem:[#allocation2 + $0x50] sm:$0xff] %v414
        %427 = vst [vmem:[#allocation2 + $0x58] sm:$0xff] %v415
        %v428 = vld [vmem:[%s2] sm:$0xff]
        %v429 = vld [vmem:[#allocation2] sm:$0xff]
        %v430 = vld [vmem:[#allocation2 + $0x8] sm:$0xff]
        %v431 = vld [vmem:[#allocation2 + $0x10] sm:$0xff]
        %v432 = vld [vmem:[#allocation2 + $0x18] sm:$0xff]
        %v433 = vld [vmem:[#allocation2 + $0x20] sm:$0xff]
        %v434 = vld [vmem:[#allocation2 + $0x28] sm:$0xff]
        %v435 = vld [vmem:[#allocation2 + $0x30] sm:$0xff]
        %437 = vset.pattern.permute.xlu0 0
        %438 = vperm.xlu0 %437, %v428
        %v439 = vpop.permute.xlu0 %438
        %v441 = vadd.f32 %v433, %v439
        %v442 = vadd.f32 %v434, %v439
        %v443 = vadd.f32 %v435, %v439
        %447 = vrot.lane.b32.xlu0 %v441, 19
        %v448 = vpop.permute.xlu0 %447
        %449 = vrot.lane.b32.xlu0 %v442, 19
        %v450 = vpop.permute.xlu0 %449
        %451 = vrot.lane.b32.xlu0 %v443, 19
        %v452 = vpop.permute.xlu0 %451
        %vm453 = vcmask 154624
        %v454 = vsel %vm453, %v448, %v450
        %v455 = vsel %vm453, %v450, %v452
        %v460 = vmul.f32 %v429, %v448
        %v461 = vmul.f32 %v430, %v454
        %v462 = vmul.f32 %v431, %v455
        %v463 = vmul.f32 %v432, %v452
        %v464 = vld [vmem:[#allocation2 + $0x20] sm:$0xff]
        %v465 = vld [vmem:[#allocation2 + $0x28] sm:$0xff]
        %v466 = vld [vmem:[#allocation2 + $0x30] sm:$0xff]
        %v467 = vld [vmem:[#allocation2 + $0x38] sm:$0xff]
        %468 = vset.pattern.permute.xlu0 1
        %469 = vperm.xlu0 %468, %v428
        %v470 = vpop.permute.xlu0 %469
        %v472 = vadd.f32 %v464, %v470
        %v473 = vadd.f32 %v465, %v470
        %v474 = vadd.f32 %v466, %v470
        %v475 = vadd.f32 %v467, %v470
        %480 = vrot.lane.b32.xlu0 %v472, 18
        %v481 = vpop.permute.xlu0 %480
        %482 = vrot.lane.b32.xlu0 %v473, 18
        %v483 = vpop.permute.xlu0 %482
        %484 = vrot.lane.b32.xlu0 %v474, 18
        %v485 = vpop.permute.xlu0 %484
        %486 = vrot.lane.b32.xlu0 %v475, 18
        %v487 = vpop.permute.xlu0 %486
        %vm488 = vcmask 146432
        %v489 = vsel %vm488, %v481, %v483
        %v490 = vsel %vm488, %v483, %v485
        %v491 = vsel %vm488, %v485, %v487
        %v496 = vmul.f32 %v429, %v481
        %v497 = vmul.f32 %v430, %v489
        %v498 = vmul.f32 %v431, %v490
        %v499 = vmul.f32 %v432, %v491
        %v500 = vmax.f32 %v460, %v496
        %v501 = vmax.f32 %v461, %v497
        %v502 = vmax.f32 %v462, %v498
        %v503 = vmax.f32 %v463, %v499
        %504 = vset.pattern.permute.xlu0 2
        %505 = vperm.xlu0 %504, %v428
        %v506 = vpop.permute.xlu0 %505
        %v508 = vadd.f32 %v464, %v506
        %v509 = vadd.f32 %v465, %v506
        %v510 = vadd.f32 %v466, %v506
        %v511 = vadd.f32 %v467, %v506
        %516 = vrot.lane.b32.xlu0 %v508, 17
        %v517 = vpop.permute.xlu0 %516
        %518 = vrot.lane.b32.xlu0 %v509, 17
        %v519 = vpop.permute.xlu0 %518
        %520 = vrot.lane.b32.xlu0 %v510, 17
        %v521 = vpop.permute.xlu0 %520
        %522 = vrot.lane.b32.xlu0 %v511, 17
        %v523 = vpop.permute.xlu0 %522
        %vm524 = vcmask 138240
        %v525 = vsel %vm524, %v517, %v519
        %v526 = vsel %vm524, %v519, %v521
        %v527 = vsel %vm524, %v521, %v523
        %v532 = vmul.f32 %v429, %v517
        %v533 = vmul.f32 %v430, %v525
        %v534 = vmul.f32 %v431, %v526
        %v535 = vmul.f32 %v432, %v527
        %v536 = vmax.f32 %v500, %v532
        %v537 = vmax.f32 %v501, %v533
        %v538 = vmax.f32 %v502, %v534
        %v539 = vmax.f32 %v503, %v535
        %540 = vset.pattern.permute.xlu0 3
        %541 = vperm.xlu0 %540, %v428
        %v542 = vpop.permute.xlu0 %541
        %v544 = vadd.f32 %v464, %v542
        %v545 = vadd.f32 %v465, %v542
        %v546 = vadd.f32 %v466, %v542
        %v547 = vadd.f32 %v467, %v542
        %552 = vrot.lane.b32.xlu0 %v544, 1
        %v553 = vpop.permute.xlu0 %552
        %554 = vrot.lane.b32.xlu0 %v545, 1
        %v555 = vpop.permute.xlu0 %554
        %556 = vrot.lane.b32.xlu0 %v546, 1
        %v557 = vpop.permute.xlu0 %556
        %558 = vrot.lane.b32.xlu0 %v547, 1
        %v559 = vpop.permute.xlu0 %558
        %vm560 = vcmask 7168
        %v561 = vsel %vm560, %v553, %v555
        %v562 = vsel %vm560, %v555, %v557
        %v563 = vsel %vm560, %v557, %v559
        %v568 = vmul.f32 %v429, %v553
        %v569 = vmul.f32 %v430, %v561
        %v570 = vmul.f32 %v431, %v562
        %v571 = vmul.f32 %v432, %v563
        %v572 = vmax.f32 %v536, %v568
        %v573 = vmax.f32 %v537, %v569
        %v574 = vmax.f32 %v538, %v570
        %v575 = vmax.f32 %v539, %v571
        %576 = vset.pattern.permute.xlu0 4
        %577 = vperm.xlu0 %576, %v428
        %v578 = vpop.permute.xlu0 %577
        %v580 = vadd.f32 %v464, %v578
        %v581 = vadd.f32 %v465, %v578
        %v582 = vadd.f32 %v466, %v578
        %v583 = vadd.f32 %v467, %v578
        %v584 = vmul.f32 %v429, %v580
        %v585 = vmul.f32 %v430, %v581
        %v586 = vmul.f32 %v431, %v582
        %v587 = vmul.f32 %v432, %v583
        %v588 = vmax.f32 %v572, %v584
        %v589 = vmax.f32 %v573, %v585
        %v590 = vmax.f32 %v574, %v586
        %v591 = vmax.f32 %v575, %v587
        %592 = vset.pattern.permute.xlu0 5
        %593 = vperm.xlu0 %592, %v428
        %v594 = vpop.permute.xlu0 %593
        %v596 = vadd.f32 %v464, %v594
        %v597 = vadd.f32 %v465, %v594
        %v598 = vadd.f32 %v466, %v594
        %v599 = vadd.f32 %v467, %v594
        %604 = vrot.lane.b32.xlu0 %v596, 127
        %v605 = vpop.permute.xlu0 %604
        %606 = vrot.lane.b32.xlu0 %v597, 127
        %v607 = vpop.permute.xlu0 %606
        %608 = vrot.lane.b32.xlu0 %v598, 127
        %v609 = vpop.permute.xlu0 %608
        %610 = vrot.lane.b32.xlu0 %v599, 127
        %v611 = vpop.permute.xlu0 %610
        %vm612 = vcmask 1039360
        %v613 = vsel %vm612, %v605, %v607
        %v614 = vsel %vm612, %v607, %v609
        %v615 = vsel %vm612, %v609, %v611
        %v620 = vmul.f32 %v429, %v613
        %v621 = vmul.f32 %v430, %v614
        %v622 = vmul.f32 %v431, %v615
        %v623 = vmul.f32 %v432, %v611
        %v624 = vmax.f32 %v588, %v620
        %v625 = vmax.f32 %v589, %v621
        %v626 = vmax.f32 %v590, %v622
        %v627 = vmax.f32 %v591, %v623
        %628 = vset.pattern.permute.xlu0 6
        %629 = vperm.xlu0 %628, %v428
        %v630 = vpop.permute.xlu0 %629
        %v632 = vadd.f32 %v464, %v630
        %v633 = vadd.f32 %v465, %v630
        %v634 = vadd.f32 %v466, %v630
        %v635 = vadd.f32 %v467, %v630
        %640 = vrot.lane.b32.xlu0 %v632, 111
        %v641 = vpop.permute.xlu0 %640
        %642 = vrot.lane.b32.xlu0 %v633, 111
        %v643 = vpop.permute.xlu0 %642
        %644 = vrot.lane.b32.xlu0 %v634, 111
        %v645 = vpop.permute.xlu0 %644
        %646 = vrot.lane.b32.xlu0 %v635, 111
        %v647 = vpop.permute.xlu0 %646
        %vm648 = vcmask 908288
        %v649 = vsel %vm648, %v641, %v643
        %v650 = vsel %vm648, %v643, %v645
        %v651 = vsel %vm648, %v645, %v647
        %v656 = vmul.f32 %v429, %v649
        %v657 = vmul.f32 %v430, %v650
        %v658 = vmul.f32 %v431, %v651
        %v659 = vmul.f32 %v432, %v647
        %v660 = vmax.f32 %v624, %v656
        %v661 = vmax.f32 %v625, %v657
        %v662 = vmax.f32 %v626, %v658
        %v663 = vmax.f32 %v627, %v659
        %664 = vset.pattern.permute.xlu0 7
        %665 = vperm.xlu0 %664, %v428
        %v666 = vpop.permute.xlu0 %665
        %v668 = vadd.f32 %v464, %v666
        %v669 = vadd.f32 %v465, %v666
        %v670 = vadd.f32 %v466, %v666
        %v671 = vadd.f32 %v467, %v666
        %676 = vrot.lane.b32.xlu0 %v668, 110
        %v677 = vpop.permute.xlu0 %676
        %678 = vrot.lane.b32.xlu0 %v669, 110
        %v679 = vpop.permute.xlu0 %678
        %680 = vrot.lane.b32.xlu0 %v670, 110
        %v681 = vpop.permute.xlu0 %680
        %682 = vrot.lane.b32.xlu0 %v671, 110
        %v683 = vpop.permute.xlu0 %682
        %vm684 = vcmask 900096
        %v685 = vsel %vm684, %v677, %v679
        %v686 = vsel %vm684, %v679, %v681
        %v687 = vsel %vm684, %v681, %v683
        %v692 = vmul.f32 %v429, %v685
        %v693 = vmul.f32 %v430, %v686
        %v694 = vmul.f32 %v431, %v687
        %v695 = vmul.f32 %v432, %v683
        %v696 = vmax.f32 %v660, %v692
        %v697 = vmax.f32 %v661, %v693
        %v698 = vmax.f32 %v662, %v694
        %v699 = vmax.f32 %v663, %v695
        %700 = vset.pattern.permute.xlu0 8
        %701 = vperm.xlu0 %700, %v428
        %v702 = vpop.permute.xlu0 %701
        %v704 = vadd.f32 %v464, %v702
        %v705 = vadd.f32 %v465, %v702
        %v706 = vadd.f32 %v466, %v702
        %v707 = vadd.f32 %v467, %v702
        %712 = vrot.lane.b32.xlu0 %v704, 109
        %v713 = vpop.permute.xlu0 %712
        %714 = vrot.lane.b32.xlu0 %v705, 109
        %v715 = vpop.permute.xlu0 %714
        %716 = vrot.lane.b32.xlu0 %v706, 109
        %v717 = vpop.permute.xlu0 %716
        %718 = vrot.lane.b32.xlu0 %v707, 109
        %v719 = vpop.permute.xlu0 %718
        %vm720 = vcmask 891904
        %v721 = vsel %vm720, %v713, %v715
        %v722 = vsel %vm720, %v715, %v717
        %v723 = vsel %vm720, %v717, %v719
        %v728 = vmul.f32 %v429, %v721
        %v729 = vmul.f32 %v430, %v722
        %v730 = vmul.f32 %v431, %v723
        %v731 = vmul.f32 %v432, %v719
        %v732 = vmax.f32 %v696, %v728
        %v733 = vmax.f32 %v697, %v729
        %v734 = vmax.f32 %v698, %v730
        %v735 = vmax.f32 %v699, %v731
        %v736 = vsub.f32 %v460, %v732
        %v737 = vsub.f32 %v461, %v733
        %v738 = vsub.f32 %v462, %v734
        %v739 = vsub.f32 %v463, %v735
        %v740 = vmul.f32 %v736, 1.442695
        %v741 = vpow.pop %v740
        %v742 = vmul.f32 %v737, 1.442695
        %v743 = vpow.pop %v742
        %v744 = vmul.f32 %v738, 1.442695
        %v745 = vpow.pop %v744
        %v746 = vmul.f32 %v739, 1.442695
        %v747 = vpow.pop %v746
        %v748 = vld [vmem:[#allocation2 + $0x40] sm:$0xff]
        %v749 = vld [vmem:[#allocation2 + $0x48] sm:$0xff]
        %v750 = vld [vmem:[#allocation2 + $0x50] sm:$0xff]
        %754 = vrot.lane.b32.xlu0 %v748, 19
        %v755 = vpop.permute.xlu0 %754
        %756 = vrot.lane.b32.xlu0 %v749, 19
        %v757 = vpop.permute.xlu0 %756
        %758 = vrot.lane.b32.xlu0 %v750, 19
        %v759 = vpop.permute.xlu0 %758
        %v760 = vsel %vm453, %v755, %v757
        %v761 = vsel %vm453, %v757, %v759
        %v766 = vmul.f32 %v741, %v755
        %v767 = vmul.f32 %v743, %v760
        %v768 = vmul.f32 %v745, %v761
        %v769 = vmul.f32 %v747, %v759
        %v770 = vsub.f32 %v496, %v732
        %v771 = vsub.f32 %v497, %v733
        %v772 = vsub.f32 %v498, %v734
        %v773 = vsub.f32 %v499, %v735
        %v774 = vmul.f32 %v770, 1.442695
        %v775 = vpow.pop %v774
        %v776 = vmul.f32 %v771, 1.442695
        %v777 = vpow.pop %v776
        %v778 = vmul.f32 %v772, 1.442695
        %v779 = vpow.pop %v778
        %v780 = vmul.f32 %v773, 1.442695
        %v781 = vpow.pop %v780
        %v782 = vld [vmem:[#allocation2 + $0x40] sm:$0xff]
        %v783 = vld [vmem:[#allocation2 + $0x48] sm:$0xff]
        %v784 = vld [vmem:[#allocation2 + $0x50] sm:$0xff]
        %v785 = vld [vmem:[#allocation2 + $0x58] sm:$0xff]
        %790 = vrot.lane.b32.xlu0 %v782, 18
        %v791 = vpop.permute.xlu0 %790
        %792 = vrot.lane.b32.xlu0 %v783, 18
        %v793 = vpop.permute.xlu0 %792
        %794 = vrot.lane.b32.xlu0 %v784, 18
        %v795 = vpop.permute.xlu0 %794
        %796 = vrot.lane.b32.xlu0 %v785, 18
        %v797 = vpop.permute.xlu0 %796
        %v798 = vsel %vm488, %v791, %v793
        %v799 = vsel %vm488, %v793, %v795
        %v800 = vsel %vm488, %v795, %v797
        %v805 = vmul.f32 %v775, %v791
        %v806 = vmul.f32 %v777, %v798
        %v807 = vmul.f32 %v779, %v799
        %v808 = vmul.f32 %v781, %v800
        %v809 = vadd.f32 %v741, %v775
        %v810 = vadd.f32 %v743, %v777
        %v811 = vadd.f32 %v745, %v779
        %v812 = vadd.f32 %v747, %v781
        %v813 = vadd.f32 %v766, %v805
        %v814 = vadd.f32 %v767, %v806
        %v815 = vadd.f32 %v768, %v807
        %v816 = vadd.f32 %v769, %v808
        %v817 = vsub.f32 %v532, %v732
        %v818 = vsub.f32 %v533, %v733
        %v819 = vsub.f32 %v534, %v734
        %v820 = vsub.f32 %v535, %v735
        %v821 = vmul.f32 %v817, 1.442695
        %v822 = vpow.pop %v821
        %v823 = vmul.f32 %v818, 1.442695
        %v824 = vpow.pop %v823
        %v825 = vmul.f32 %v819, 1.442695
        %v826 = vpow.pop %v825
        %v827 = vmul.f32 %v820, 1.442695
        %v828 = vpow.pop %v827
        %829 = vrot.lane.b32.xlu0 %v782, 17
        %v830 = vpop.permute.xlu0 %829
        %831 = vrot.lane.b32.xlu0 %v783, 17
        %v832 = vpop.permute.xlu0 %831
        %833 = vrot.lane.b32.xlu0 %v784, 17
        %v834 = vpop.permute.xlu0 %833
        %835 = vrot.lane.b32.xlu0 %v785, 17
        %v836 = vpop.permute.xlu0 %835
        %v837 = vsel %vm524, %v830, %v832
        %v838 = vsel %vm524, %v832, %v834
        %v839 = vsel %vm524, %v834, %v836
        %v844 = vmul.f32 %v822, %v830
        %v845 = vmul.f32 %v824, %v837
        %v846 = vmul.f32 %v826, %v838
        %v847 = vmul.f32 %v828, %v839
        %v848 = vadd.f32 %v809, %v822
        %v849 = vadd.f32 %v810, %v824
        %v850 = vadd.f32 %v811, %v826
        %v851 = vadd.f32 %v812, %v828
        %v852 = vadd.f32 %v813, %v844
        %v853 = vadd.f32 %v814, %v845
        %v854 = vadd.f32 %v815, %v846
        %v855 = vadd.f32 %v816, %v847
        %v856 = vsub.f32 %v568, %v732
        %v857 = vsub.f32 %v569, %v733
        %v858 = vsub.f32 %v570, %v734
        %v859 = vsub.f32 %v571, %v735
        %v860 = vmul.f32 %v856, 1.442695
        %v861 = vpow.pop %v860
        %v862 = vmul.f32 %v857, 1.442695
        %v863 = vpow.pop %v862
        %v864 = vmul.f32 %v858, 1.442695
        %v865 = vpow.pop %v864
        %v866 = vmul.f32 %v859, 1.442695
        %v867 = vpow.pop %v866
        %868 = vrot.lane.b32.xlu0 %v782, 1
        %v869 = vpop.permute.xlu0 %868
        %870 = vrot.lane.b32.xlu0 %v783, 1
        %v871 = vpop.permute.xlu0 %870
        %872 = vrot.lane.b32.xlu0 %v784, 1
        %v873 = vpop.permute.xlu0 %872
        %874 = vrot.lane.b32.xlu0 %v785, 1
        %v875 = vpop.permute.xlu0 %874
        %v876 = vsel %vm560, %v869, %v871
        %v877 = vsel %vm560, %v871, %v873
        %v878 = vsel %vm560, %v873, %v875
        %v883 = vmul.f32 %v861, %v869
        %v884 = vmul.f32 %v863, %v876
        %v885 = vmul.f32 %v865, %v877
        %v886 = vmul.f32 %v867, %v878
        %v887 = vadd.f32 %v848, %v861
        %v888 = vadd.f32 %v849, %v863
        %v889 = vadd.f32 %v850, %v865
        %v890 = vadd.f32 %v851, %v867
        %v891 = vadd.f32 %v852, %v883
        %v892 = vadd.f32 %v853, %v884
        %v893 = vadd.f32 %v854, %v885
        %v894 = vadd.f32 %v855, %v886
        %v895 = vsub.f32 %v584, %v732
        %v896 = vsub.f32 %v585, %v733
        %v897 = vsub.f32 %v586, %v734
        %v898 = vsub.f32 %v587, %v735
        %v899 = vmul.f32 %v895, 1.442695
        %v900 = vpow.pop %v899
        %v901 = vmul.f32 %v896, 1.442695
        %v902 = vpow.pop %v901
        %v903 = vmul.f32 %v897, 1.442695
        %v904 = vpow.pop %v903
        %v905 = vmul.f32 %v898, 1.442695
        %v906 = vpow.pop %v905
        %v907 = vmul.f32 %v900, %v782
        %v908 = vmul.f32 %v902, %v783
        %v909 = vmul.f32 %v904, %v784
        %v910 = vmul.f32 %v906, %v785
        %v911 = vadd.f32 %v887, %v900
        %v912 = vadd.f32 %v888, %v902
        %v913 = vadd.f32 %v889, %v904
        %v914 = vadd.f32 %v890, %v906
        %v915 = vadd.f32 %v891, %v907
        %v916 = vadd.f32 %v892, %v908
        %v917 = vadd.f32 %v893, %v909
        %v918 = vadd.f32 %v894, %v910
        %v919 = vsub.f32 %v620, %v732
        %v920 = vsub.f32 %v621, %v733
        %v921 = vsub.f32 %v622, %v734
        %v922 = vsub.f32 %v623, %v735
        %v923 = vmul.f32 %v919, 1.442695
        %v924 = vpow.pop %v923
        %v925 = vmul.f32 %v920, 1.442695
        %v926 = vpow.pop %v925
        %v927 = vmul.f32 %v921, 1.442695
        %v928 = vpow.pop %v927
        %v929 = vmul.f32 %v922, 1.442695
        %v930 = vpow.pop %v929
        %931 = vrot.lane.b32.xlu0 %v782, 127
        %v932 = vpop.permute.xlu0 %931
        %933 = vrot.lane.b32.xlu0 %v783, 127
        %v934 = vpop.permute.xlu0 %933
        %935 = vrot.lane.b32.xlu0 %v784, 127
        %v936 = vpop.permute.xlu0 %935
        %937 = vrot.lane.b32.xlu0 %v785, 127
        %v938 = vpop.permute.xlu0 %937
        %v939 = vsel %vm612, %v932, %v934
        %v940 = vsel %vm612, %v934, %v936
        %v941 = vsel %vm612, %v936, %v938
        %v946 = vmul.f32 %v924, %v939
        %v947 = vmul.f32 %v926, %v940
        %v948 = vmul.f32 %v928, %v941
        %v949 = vmul.f32 %v930, %v938
        %v950 = vadd.f32 %v911, %v924
        %v951 = vadd.f32 %v912, %v926
        %v952 = vadd.f32 %v913, %v928
        %v953 = vadd.f32 %v914, %v930
        %v954 = vadd.f32 %v915, %v946
        %v955 = vadd.f32 %v916, %v947
        %v956 = vadd.f32 %v917, %v948
        %v957 = vadd.f32 %v918, %v949
        %v958 = vsub.f32 %v656, %v732
        %v959 = vsub.f32 %v657, %v733
        %v960 = vsub.f32 %v658, %v734
        %v961 = vsub.f32 %v659, %v735
        %v962 = vmul.f32 %v958, 1.442695
        %v963 = vpow.pop %v962
        %v964 = vmul.f32 %v959, 1.442695
        %v965 = vpow.pop %v964
        %v966 = vmul.f32 %v960, 1.442695
        %v967 = vpow.pop %v966
        %v968 = vmul.f32 %v961, 1.442695
        %v969 = vpow.pop %v968
        %970 = vrot.lane.b32.xlu0 %v782, 111
        %v971 = vpop.permute.xlu0 %970
        %972 = vrot.lane.b32.xlu0 %v783, 111
        %v973 = vpop.permute.xlu0 %972
        %974 = vrot.lane.b32.xlu0 %v784, 111
        %v975 = vpop.permute.xlu0 %974
        %976 = vrot.lane.b32.xlu0 %v785, 111
        %v977 = vpop.permute.xlu0 %976
        %v978 = vsel %vm648, %v971, %v973
        %v979 = vsel %vm648, %v973, %v975
        %v980 = vsel %vm648, %v975, %v977
        %v985 = vmul.f32 %v963, %v978
        %v986 = vmul.f32 %v965, %v979
        %v987 = vmul.f32 %v967, %v980
        %v988 = vmul.f32 %v969, %v977
        %v989 = vadd.f32 %v950, %v963
        %v990 = vadd.f32 %v951, %v965
        %v991 = vadd.f32 %v952, %v967
        %v992 = vadd.f32 %v953, %v969
        %v993 = vadd.f32 %v954, %v985
        %v994 = vadd.f32 %v955, %v986
        %v995 = vadd.f32 %v956, %v987
        %v996 = vadd.f32 %v957, %v988
        %v997 = vsub.f32 %v692, %v732
        %v998 = vsub.f32 %v693, %v733
        %v999 = vsub.f32 %v694, %v734
        %v1000 = vsub.f32 %v695, %v735
        %v1001 = vmul.f32 %v997, 1.442695
        %v1002 = vpow.pop %v1001
        %v1003 = vmul.f32 %v998, 1.442695
        %v1004 = vpow.pop %v1003
        %v1005 = vmul.f32 %v999, 1.442695
        %v1006 = vpow.pop %v1005
        %v1007 = vmul.f32 %v1000, 1.442695
        %v1008 = vpow.pop %v1007
        %1009 = vrot.lane.b32.xlu0 %v782, 110
        %v1010 = vpop.permute.xlu0 %1009
        %1011 = vrot.lane.b32.xlu0 %v783, 110
        %v1012 = vpop.permute.xlu0 %1011
        %1013 = vrot.lane.b32.xlu0 %v784, 110
        %v1014 = vpop.permute.xlu0 %1013
        %1015 = vrot.lane.b32.xlu0 %v785, 110
        %v1016 = vpop.permute.xlu0 %1015
        %v1017 = vsel %vm684, %v1010, %v1012
        %v1018 = vsel %vm684, %v1012, %v1014
        %v1019 = vsel %vm684, %v1014, %v1016
        %v1024 = vmul.f32 %v1002, %v1017
        %v1025 = vmul.f32 %v1004, %v1018
        %v1026 = vmul.f32 %v1006, %v1019
        %v1027 = vmul.f32 %v1008, %v1016
        %v1028 = vadd.f32 %v989, %v1002
        %v1029 = vadd.f32 %v990, %v1004
        %v1030 = vadd.f32 %v991, %v1006
        %v1031 = vadd.f32 %v992, %v1008
        %v1032 = vadd.f32 %v993, %v1024
        %v1033 = vadd.f32 %v994, %v1025
        %v1034 = vadd.f32 %v995, %v1026
        %v1035 = vadd.f32 %v996, %v1027
        %v1036 = vsub.f32 %v728, %v732
        %v1037 = vsub.f32 %v729, %v733
        %v1038 = vsub.f32 %v730, %v734
        %v1039 = vsub.f32 %v731, %v735
        %v1040 = vmul.f32 %v1036, 1.442695
        %v1041 = vpow.pop %v1040
        %v1042 = vmul.f32 %v1037, 1.442695
        %v1043 = vpow.pop %v1042
        %v1044 = vmul.f32 %v1038, 1.442695
        %v1045 = vpow.pop %v1044
        %v1046 = vmul.f32 %v1039, 1.442695
        %v1047 = vpow.pop %v1046
        %1048 = vrot.lane.b32.xlu0 %v782, 109
        %v1049 = vpop.permute.xlu0 %1048
        %1050 = vrot.lane.b32.xlu0 %v783, 109
        %v1051 = vpop.permute.xlu0 %1050
        %1052 = vrot.lane.b32.xlu0 %v784, 109
        %v1053 = vpop.permute.xlu0 %1052
        %1054 = vrot.lane.b32.xlu0 %v785, 109
        %v1055 = vpop.permute.xlu0 %1054
        %v1056 = vsel %vm720, %v1049, %v1051
        %v1057 = vsel %vm720, %v1051, %v1053
        %v1058 = vsel %vm720, %v1053, %v1055
        %v1063 = vmul.f32 %v1041, %v1056
        %v1064 = vmul.f32 %v1043, %v1057
        %v1065 = vmul.f32 %v1045, %v1058
        %v1066 = vmul.f32 %v1047, %v1055
        %v1067 = vadd.f32 %v1028, %v1041
        %v1068 = vadd.f32 %v1029, %v1043
        %v1069 = vadd.f32 %v1030, %v1045
        %v1070 = vadd.f32 %v1031, %v1047
        %v1071 = vadd.f32 %v1032, %v1063
        %v1072 = vadd.f32 %v1033, %v1064
        %v1073 = vadd.f32 %v1034, %v1065
        %v1074 = vadd.f32 %v1035, %v1066
        %v1075 = vrcp.pop %v1067
        %v1076 = vrcp.pop %v1068
        %v1077 = vrcp.pop %v1069
        %v1078 = vrcp.pop %v1070
        %v1079 = vmul.f32 %v1071, %v1075
        %v1080 = vmul.f32 %v1072, %v1076
        %v1081 = vmul.f32 %v1073, %v1077
        %v1082 = vmul.f32 %v1074, %v1078
        %1087 = vrot.lane.b32.xlu0 %v1079, 109
        %v1088 = vpop.permute.xlu0 %1087
        %1089 = vrot.lane.b32.xlu0 %v1080, 109
        %v1090 = vpop.permute.xlu0 %1089
        %1091 = vrot.lane.b32.xlu0 %v1081, 109
        %v1092 = vpop.permute.xlu0 %1091
        %1093 = vrot.lane.b32.xlu0 %v1082, 109
        %v1094 = vpop.permute.xlu0 %1093
        %v1095 = vsel %vm720, %v1088, %v1090
        %v1096 = vsel %vm720, %v1090, %v1092
        %v1097 = vsel %vm720, %v1092, %v1094
        %1101 = vst [vmem:[%s186] sm:$0xff] %v1095
        %1102 = vst [vmem:[%s186 + $0x8] sm:$0xff] %v1096
        %1103 = vst [vmem:[%s186 + $0x10] sm:$0xff] %v1097
        %s1104 = sand.u32 %s96, 1
        %s1105 = scalar_lea.sflag [#allocation5], %s1104
        %s1106 = sand.u32 %s96, 1
        %s1107 = smul.addr %s1106, 24
        %s1108 = scalar_lea.vmem [#allocation6], %s1107
        // Predicated region
        $region37: #{tpu_custom_call.1} parent=31 // pred_check
          %p1109 = pneg %p106
        $region38: #{tpu_custom_call.1} parent=31 // pred_check_branch
          %1111 = sbr.rel (%p1109) target = $region40
        $region39: #{tpu_custom_call.1} parent=31 // pred_region
          %s1113 = ssub.s32 384, 384
          %1114 = vsyncadd %s1105, %s1113
          %s1115 = smul.addr %s20, 3
          %s1116 = smul.addr %s1115, 128
          %s1117 = scalar_lea.hbm %s3, %s1116
          %s1119 = sshll.u32 %s1108, 4
          %s1120 = int_to_ptr.vmem [resolvable:$true] %s1119
          %1122 = dma.vmem_to_hbm [thread:$0]  %s1120, 384, %s1117, %s1105
        $region40: #{tpu_custom_call.1} parent=31 // pred_fallthru
          _
      $region32: #{tpu_custom_call.1} parent=5 // pred_fallthru
        _
      %p1123 = scmp.le.s32.totalorder 2, %s15
      // Predicated region
      $region41: #{tpu_custom_call.1} parent=5 // pred_check
        %p1124 = pneg %p1123
      $region42: #{tpu_custom_call.1} parent=5 // pred_check_branch
        %1126 = sbr.rel (%p1124) target = $region44
      $region43: #{tpu_custom_call.1} parent=5 // pred_region
        %s1127 = ssub.s32 %s15, 2
        // Predicated region
        $region45: #{tpu_custom_call.1} parent=43 // pred_check
          %p1128 = pneg %p112
        $region46: #{tpu_custom_call.1} parent=43 // pred_check_branch
          %1130 = sbr.rel (%p1128) target = $region48
        $region47: #{tpu_custom_call.1} parent=43 // pred_region
          %s1131 = sand.u32 %s97, 1
          %s1132 = scalar_lea.sflag [#allocation5], %s1131
          %s1133 = sand.u32 %s97, 1
          %s1134 = smul.addr %s1133, 24
          %s1135 = scalar_lea.vmem [#allocation6], %s1134
          %1136 = dma.done %s1132, 384
        $region48: #{tpu_custom_call.1} parent=43 // pred_fallthru
          _
      $region44: #{tpu_custom_call.1} parent=5 // pred_fallthru
        _
    $region6: #{tpu_custom_call.1} parent=1 // loop_footer
      %s19 = sadd.s32 1, %s15
    $region7: #{tpu_custom_call.1} parent=1 // loop_footer_branch
      %14 = sbr.rel target = $region3
    $region8: #{tpu_custom_call.1} parent=1 // loop_exit
      _
    %1137 = vsyncpa [#allocation4], 1
    %s1138 = scalar_lea.sflag [#allocation4], 1
    %1139 = vsyncpa %s1138, 1
    %1140 = vsyncpa [#allocation5], 1
    %s1141 = scalar_lea.sflag [#allocation5], 1
    %1142 = vsyncpa %s1141, 1

</llo_original>
